<compile_context>
chip_gen: v5e
topology: v5e:2x2
jax: 0.10.0
libtpu: 0.0.40
codegen_flags: <defaults>
</compile_context>

<pallas_src>
import functools
import math

import jax
import jax.numpy as jnp
from jax.experimental import pallas as pl
from jax.experimental.pallas import tpu as pltpu

_LANES = 128


def _drop_path_kernel(scale_ref, x_ref, o_ref):
    # scale_ref: (B,) float32 in SMEM -- precomputed per-sample mask/keep_prob.
    # x_ref / o_ref: (1, TR, 128) VMEM tile of the flattened sample.
    b = pl.program_id(0)
    o_ref[...] = x_ref[...] * scale_ref[b].astype(x_ref.dtype)


def drop_path(x, key, drop_prob=0.0, training=False):
    """Pallas DropPath forward. x: (B, ...) -- mask broadcasts over trailing dims."""
    if drop_prob == 0.0 or not training:
        return x

    keep_prob = 1.0 - drop_prob
    orig_shape = x.shape
    B = orig_shape[0]
    total = int(math.prod(orig_shape[1:])) if x.ndim > 1 else 1

    # Per-sample Bernoulli mask * 1/keep_prob, computed once in plain JAX
    # (B scalars). Guard keep_prob == 0 so the reciprocal never blows up.
    rand = jax.random.uniform(key, (B,), dtype=jnp.float32)
    inv_keep = 0.0 if keep_prob <= 0.0 else 1.0 / keep_prob
    scale = jnp.floor(keep_prob + rand) * jnp.float32(inv_keep)

    # --- lane-dense retiling -------------------------------------------------
    x_flat = x.reshape(B, total)
    padded_total = pl.cdiv(total, _LANES) * _LANES
    if padded_total != total:
        x_flat = jnp.pad(x_flat, ((0, 0), (0, padded_total - total)))
    rows = padded_total // _LANES
    x_tiled = x_flat.reshape(B, rows, _LANES)

    itemsize = jnp.dtype(x.dtype).itemsize
    sublane = {4: 8, 2: 16, 1: 32}.get(itemsize, 8)
    # ~1 MiB block (4 live double-buffered copies -> ~4 MiB VMEM, safe on v5e/v7x).
    target_rows = max(sublane, ((1 << 20) // (_LANES * itemsize) // sublane) * sublane)
    if rows <= target_rows:
        tr = rows                 # block equals full dim -> always a legal tile
        grid_rows = 1
    else:
        tr = target_rows          # multiple of the sublane quantum
        grid_rows = pl.cdiv(rows, tr)

    kernel = functools.partial(_drop_path_kernel)
    out_tiled = pl.pallas_call(
        kernel,
        out_shape=jax.ShapeDtypeStruct((B, rows, _LANES), x.dtype),
        grid=(B, grid_rows),
        in_specs=[
            pl.BlockSpec(memory_space=pltpu.MemorySpace.SMEM),     # (B,) scales
            pl.BlockSpec((1, tr, _LANES), lambda b, r: (b, r, 0)),
        ],
        out_specs=pl.BlockSpec((1, tr, _LANES), lambda b, r: (b, r, 0)),
        compiler_params=pltpu.CompilerParams(
            dimension_semantics=("parallel", "parallel"),
            vmem_limit_bytes=64 << 20,
        ),
    )(scale, x_tiled)

    out_flat = out_tiled.reshape(B, padded_total)
    if padded_total != total:
        out_flat = out_flat[:, :total]
    return out_flat.reshape(orig_shape)


class DropPath:
    """JAX/Pallas port of the PyTorch DropPath module."""

    def __init__(self, drop_prob=None):
        self.drop_prob = drop_prob
        self.training = True

    def __call__(self, x, key):
        p = 0.0 if self.drop_prob is None else self.drop_prob
        return drop_path(x, key, drop_prob=p, training=self.training)


if __name__ == "__main__":
    key = jax.random.PRNGKey(0)
    kx, kmask = jax.random.split(key)

    B, N, D = 2, 8, 32
    x = jax.random.normal(kx, (B, N, D), dtype=jnp.float32)

    module = DropPath(drop_prob=0.5)
    module.training = True
    out = module(x, kmask)
    out = jax.block_until_ready(out)

    # Reference check (same randoms as the kernel uses).
    keep_prob = 1.0 - 0.5
    rand = jax.random.uniform(kmask, (B,), dtype=jnp.float32)
    mask = jnp.floor(keep_prob + rand).reshape(B, 1, 1)
    ref = (x / keep_prob) * mask
    assert jnp.allclose(out, ref, atol=1e-6), "mismatch vs reference"

    # Non-128-multiple trailing dims exercise the padding path.
    x_odd = jax.random.normal(kx, (B, 5, 7), dtype=jnp.float32)
    out_odd = jax.block_until_ready(drop_path(x_odd, kmask, drop_prob=0.5, training=True))
    ref_odd = (x_odd / keep_prob) * mask
    assert jnp.allclose(out_odd, ref_odd, atol=1e-6), "mismatch on padded shape"

    # Eval mode / drop_prob=0 path is identity.
    module.training = False
    out_eval = jax.block_until_ready(module(x, kmask))
    assert jnp.array_equal(out_eval, x)

    print("KERNEL_OK")
</pallas_src>

<mosaic_0001>
module attributes {stable_mosaic.version = 11 : i64} {
  func.func @_drop_path_kernel(%arg0: i32, %arg1: i32, %arg2: memref<2xf32, #tpu.memory_space<smem>>, %arg3: memref<1x2x128xf32, #tpu.memory_space<vmem>>, %arg4: memref<1x2x128xf32, #tpu.memory_space<vmem>>) attributes {dimension_semantics = [#tpu.dimension_semantics<parallel>, #tpu.dimension_semantics<parallel>], iteration_bounds = array<i64: 2, 1>, scalar_prefetch = 0 : i64, scratch_operands = 0 : i64, tpu.core_type = #tpu.core_type<tc>, window_params = [{transform_indices = @transform_0, window_bounds = array<i64: 2>}, {transform_indices = @transform_1, window_bounds = array<i64: 1, 2, 128>}, {transform_indices = @transform_2, window_bounds = array<i64: 1, 2, 128>}]} {
    %c0 = arith.constant 0 : index
    %c0_0 = arith.constant 0 : index
    %c0_1 = arith.constant 0 : index
    %0 = vector.load %arg3[%c0, %c0_0, %c0_1] : memref<1x2x128xf32, #tpu.memory_space<vmem>>, vector<1x2x128xf32>
    %1 = arith.index_cast %arg0 : i32 to index
    %2 = memref.load %arg2[%1] : memref<2xf32, #tpu.memory_space<smem>>
    %3 = vector.broadcast %2 : f32 to vector<1x2x128xf32>
    %4 = arith.mulf %0, %3 : vector<1x2x128xf32>
    %c0_2 = arith.constant 0 : index
    %c0_3 = arith.constant 0 : index
    %c0_4 = arith.constant 0 : index
    %5 = vector.load %arg4[%c0_2, %c0_3, %c0_4] : memref<1x2x128xf32, #tpu.memory_space<vmem>>, vector<1x2x128xf32>
    tpu.vector_store %arg4[%c0_2, %c0_3, %c0_4], %4 {strides = array<i32>} : memref<1x2x128xf32, #tpu.memory_space<vmem>>, vector<1x2x128xf32>,
    return
  }
  func.func @transform_0(%arg0: i32, %arg1: i32) -> i32 {
    %c0_i32 = arith.constant 0 : i32
    %c0_i32_0 = arith.constant 0 : i32
    return %c0_i32 : i32
  }
  func.func @transform_1(%arg0: i32, %arg1: i32) -> (i32, i32, i32) {
    %c0_i32 = arith.constant 0 : i32
    %c0_i32_0 = arith.constant 0 : i32
    return %arg0, %arg1, %c0_i32 : i32, i32, i32
  }
  func.func @transform_2(%arg0: i32, %arg1: i32) -> (i32, i32, i32) {
    %c0_i32 = arith.constant 0 : i32
    %c0_i32_0 = arith.constant 0 : i32
    return %arg0, %arg1, %c0_i32 : i32, i32, i32
  }
}

</mosaic_0001>

<llo_original>
// kernel: tpu_custom_call.1
$region0: #{tpu_custom_call.1}
  #allocation0 [shape = 'u32[]', space=smem, size = 0x4, offset = 0x4, fixed_abs, tag = 'smem constant byte address 0x4 - core index']
  #allocation1 [shape = 'u32[72,128]{1,0:T(1,128)}', space=vmem, size = 0x9000, scoped, tag = 'internal scratch']
  %s0 = inlined_call_operand.hbm [shape: f32[2], index: 0, kind: input, shape index: {}]
  %s1 = inlined_call_operand.hbm [shape: f32[2,2,128], index: 1, kind: input, shape index: {}]
  %s2 = inlined_call_operand.hbm [shape: f32[2,2,128], index: 2, kind: output, shape index: {}]
  %s3 = sld [smem:[#allocation0]]
  $region49: #{tpu_custom_call.1} parent=0
    _
  %s5 = ssub.s32 1, %s3
  %s6 = scalar_select 0, %s5, %s3
  $region1: #{tpu_custom_call.1} parent=0
    #allocation2 [shape = 'u8[512]{0}', space=smem, size = 0x200, scoped, tag = 'input window, operand 0, single buffered']
    #allocation3 [shape = 's32[2]{0}', space=sflag, size = 0x8, scoped, tag = 'scoped memory for tpu_custom_call.1']
    #allocation4 [shape = 's32[2]{0}', space=sflag, size = 0x8, scoped, tag = 'scoped memory for tpu_custom_call.1']
    #allocation5 [shape = 's32[2]{0}', space=sflag, size = 0x8, scoped, tag = 'scoped memory for tpu_custom_call.1']
    #allocation6 [shape = 'u8[2048]{0}', space=vmem, size = 0x800, scoped, tag = 'input window, operand 1']
    #allocation7 [shape = 'u8[2048]{0}', space=vmem, size = 0x800, scoped, tag = 'output window, operand 0']
    %7 = vsyncpa [#allocation5], 0
    %8 = vsyncpa [#allocation3], 0
    %s9 = scalar_lea.sflag [#allocation3], 1
    %10 = vsyncpa %s9, 0
    %11 = vsyncpa [#allocation4], 0
    %s12 = scalar_lea.sflag [#allocation4], 1
    %13 = vsyncpa %s12, 0
    loop: start=0, step=1, limit=4
    $region2: #{tpu_custom_call.1} parent=1 // loop_pre_header
      _
    $region3: #{tpu_custom_call.1} parent=1 // loop_header
      %s15 = sphi 0, %s19
      %p16 = scmp.ge.s32.totalorder %s15, 4
      %s22 = sphi 0, %s34
      %s23 = sphi 0, %s30
      %s24 = sphi 0, %s22
      %s25 = sphi 0, %s23
      %s26 = sphi 0, %s24
      %s27 = sphi 0, %s25
      %s35 = sphi 0, %s35
      %s37 = sphi 0, %s35
      %s38 = sphi 0, %s37
      %s52 = sphi 0, %s38
      %s60 = sphi 0, %s62
      %s63 = sphi 0, %s60
      %s64 = sphi 0, %s63
      %s80 = sphi 0, %s64
      %s88 = sphi 0, %s90
      %s91 = sphi 0, %s88
      %s92 = sphi 0, %s91
      %s108 = sphi 0, %s92
    $region4: #{tpu_custom_call.1} parent=1 // loop_header_branch
      %18 = sbr.rel (%p16) target = $region8
    $region5: #{tpu_custom_call.1} parent=1 // loop_body
      %s20 = ssub.s32 %s15, 1
      %s21 = ssub.s32 %s15, 2
      %s28 = sadd.s32 1, %s23
      %p29 = scmp.ge.s32.totalorder %s28, 1
      %s30 = scalar_select %p29, 0, %s28
      %s31 = sadd.s32 1, %s22
      %s32 = scalar_select %p29, %s31, %s22
      %p33 = scmp.ge.s32.totalorder %s32, 2
      %s34 = scalar_select %p33, 0, %s32
      %s36 = sadd.s32 %s35, 1
      %p39 = scmp.eq.s32.totalorder %s15, 1
      %p40 = scmp.ne.s32.totalorder %s35, %s37
      %p41 = scmp.eq.s32.totalorder %s15, 0
      %p42 = por %p40, %p41
      %p43 = scmp.ne.s32.totalorder %s35, %s37
      %p44 = scmp.eq.s32.totalorder %s20, 1
      %p45 = por %p43, %p44
      %p46 = scmp.ne.s32.totalorder %s37, %s38
      %p47 = scmp.eq.s32.totalorder %s20, 0
      %p48 = por %p46, %p47
      %p49 = scmp.ne.s32.totalorder %s37, %s38
      %p50 = scmp.eq.s32.totalorder %s21, 1
      %p51 = por %p49, %p50
      %p53 = scmp.ne.s32.totalorder %s38, %s52
      %p54 = scmp.eq.s32.totalorder %s21, 0
      %p55 = por %p53, %p54
      %s56 = ssub.s32 %s22, %s34
      %s57 = ssub.s32 %s23, %s30
      %s58 = sor.u32 %s56, %s57
      %p59 = scmp.eq.s32.totalorder %s58, 0
      %s61 = sadd.s32 %s60, 1
      %s62 = scalar_select %p59, %s60, %s61
      %p65 = pneg %p59
      %p66 = scmp.eq.s32.totalorder %s15, 1
      %p67 = por %p65, %p66
      %p68 = scmp.ne.s32.totalorder %s60, %s63
      %p69 = scmp.eq.s32.totalorder %s15, 0
      %p70 = por %p68, %p69
      %p71 = scmp.ne.s32.totalorder %s60, %s63
      %p72 = scmp.eq.s32.totalorder %s20, 1
      %p73 = por %p71, %p72
      %p74 = scmp.ne.s32.totalorder %s63, %s64
      %p75 = scmp.eq.s32.totalorder %s20, 0
      %p76 = por %p74, %p75
      %p77 = scmp.ne.s32.totalorder %s63, %s64
      %p78 = scmp.eq.s32.totalorder %s21, 1
      %p79 = por %p77, %p78
      %p81 = scmp.ne.s32.totalorder %s64, %s80
      %p82 = scmp.eq.s32.totalorder %s21, 0
      %p83 = por %p81, %p82
      %s84 = ssub.s32 %s22, %s34
      %s85 = ssub.s32 %s23, %s30
      %s86 = sor.u32 %s84, %s85
      %p87 = scmp.eq.s32.totalorder %s86, 0
      %s89 = sadd.s32 %s88, 1
      %s90 = scalar_select %p87, %s88, %s89
      %p93 = pneg %p87
      %p94 = scmp.eq.s32.totalorder %s15, 1
      %p95 = por %p93, %p94
      %p96 = scmp.ne.s32.totalorder %s88, %s91
      %p97 = scmp.eq.s32.totalorder %s15, 0
      %p98 = por %p96, %p97
      %p99 = scmp.ne.s32.totalorder %s88, %s91
      %p100 = scmp.eq.s32.totalorder %s20, 1
      %p101 = por %p99, %p100
      %p102 = scmp.ne.s32.totalorder %s91, %s92
      %p103 = scmp.eq.s32.totalorder %s20, 0
      %p104 = por %p102, %p103
      %p105 = scmp.ne.s32.totalorder %s91, %s92
      %p106 = scmp.eq.s32.totalorder %s21, 1
      %p107 = por %p105, %p106
      %p109 = scmp.ne.s32.totalorder %s92, %s108
      %p110 = scmp.eq.s32.totalorder %s21, 0
      %p111 = por %p109, %p110
      %p112 = scmp.le.s32.totalorder 1, %s15
      %p113 = scmp.lt.s32.totalorder %s15, 3
      %p114 = pnand %p112, %p113
      %p115 = pneg %p114
      // Predicated region
      $region9: #{tpu_custom_call.1} parent=5 // pred_check
        _
      $region10: #{tpu_custom_call.1} parent=5 // pred_check_branch
        %117 = sbr.rel (%p114) target = $region12
      $region11: #{tpu_custom_call.1} parent=5 // pred_region
        %s118 = ssub.s32 %s15, 1
        // Predicated region
        $region13: #{tpu_custom_call.1} parent=11 // pred_check
          %p119 = pneg %p48
        $region14: #{tpu_custom_call.1} parent=11 // pred_check_branch
          %121 = sbr.rel (%p119) target = $region16
        $region15: #{tpu_custom_call.1} parent=11 // pred_region
          %123 = vsyncadd [#allocation5], 0
          %s125 = sshll.u32 %s0, 4
          %s126 = int_to_ptr.hbm [resolvable:$true] %s125
          %128 = dma.hbm_to_smem %s126, 16, [#allocation2], [#allocation5]
        $region16: #{tpu_custom_call.1} parent=11 // pred_fallthru
          _
      $region12: #{tpu_custom_call.1} parent=5 // pred_fallthru
        _
      %p129 = scmp.lt.s32.totalorder %s15, 2
      // Predicated region
      $region17: #{tpu_custom_call.1} parent=5 // pred_check
        %p130 = pneg %p129
      $region18: #{tpu_custom_call.1} parent=5 // pred_check_branch
        %132 = sbr.rel (%p130) target = $region20
      $region19: #{tpu_custom_call.1} parent=5 // pred_region
        // Predicated region
        $region21: #{tpu_custom_call.1} parent=19 // pred_check
          %p133 = pneg %p70
        $region22: #{tpu_custom_call.1} parent=19 // pred_check_branch
          %135 = sbr.rel (%p133) target = $region24
        $region23: #{tpu_custom_call.1} parent=19 // pred_region
          %s136 = sand.u32 %s60, 1
          %s137 = scalar_lea.sflag [#allocation3], %s136
          %s138 = sand.u32 %s60, 1
          %s139 = smul.addr %s138, 2
          %s140 = scalar_lea.vmem [#allocation6], %s139
          %142 = vsyncadd %s137, 0
          %s143 = sadd.s32 %s23, %s22
          %s144 = smul.addr %s143, 2
          %s145 = scalar_lea.hbm %s1, %s144
          %s147 = sshll.u32 %s145, 4
          %s148 = int_to_ptr.hbm [resolvable:$true] %s147
          %s149 = sshll.u32 %s140, 4
          %s150 = int_to_ptr.vmem [resolvable:$true] %s149
          %152 = dma.hbm_to_vmem [thread:$0]  %s148, 32, %s150, %s137
        $region24: #{tpu_custom_call.1} parent=19 // pred_fallthru
          _
      $region20: #{tpu_custom_call.1} parent=5 // pred_fallthru
        _
      %p153 = scmp.le.s32.totalorder 1, %s15
      %p154 = scmp.lt.s32.totalorder %s15, 3
      %p155 = pnand %p153, %p154
      %p156 = pneg %p155
      // Predicated region
      $region25: #{tpu_custom_call.1} parent=5 // pred_check
        _
      $region26: #{tpu_custom_call.1} parent=5 // pred_check_branch
        %158 = sbr.rel (%p155) target = $region28
      $region27: #{tpu_custom_call.1} parent=5 // pred_region
        %s159 = ssub.s32 %s15, 1
        // Predicated region
        $region29: #{tpu_custom_call.1} parent=27 // pred_check
          %p160 = pneg %p48
        $region30: #{tpu_custom_call.1} parent=27 // pred_check_branch
          %162 = sbr.rel (%p160) target = $region32
        $region31: #{tpu_custom_call.1} parent=27 // pred_region
          %164 = dma.done [#allocation5], 16
        $region32: #{tpu_custom_call.1} parent=27 // pred_fallthru
          _
        %s165 = sand.u32 %s63, 1
        %s166 = scalar_lea.sflag [#allocation3], %s165
        %s167 = sand.u32 %s63, 1
        %s168 = smul.addr %s167, 2
        %s169 = scalar_lea.vmem [#allocation6], %s168
        // Predicated region
        $region33: #{tpu_custom_call.1} parent=27 // pred_check
          %p170 = pneg %p76
        $region34: #{tpu_custom_call.1} parent=27 // pred_check_branch
          %172 = sbr.rel (%p170) target = $region36
        $region35: #{tpu_custom_call.1} parent=27 // pred_region
          %174 = dma.done %s166, 32
        $region36: #{tpu_custom_call.1} parent=27 // pred_fallthru
          _
        %175 = sfence
        %p176 = pneg %p48
        %p177 = pneg %p45
        %s178 = sand.u32 %s63, 1
        %s179 = scalar_lea.sflag [#allocation3], %s178
        %s180 = sand.u32 %s63, 1
        %s181 = smul.addr %s180, 2
        %s182 = scalar_lea.vmem [#allocation6], %s181
        %p183 = pneg %p76
        %p184 = pneg %p73
        %p185 = pneg %p104
        %p186 = pneg %p101
        %s187 = sand.u32 %s91, 1
        %s188 = scalar_lea.sflag [#allocation4], %s187
        %s189 = sand.u32 %s91, 1
        %s190 = smul.addr %s189, 2
        %s191 = scalar_lea.vmem [#allocation7], %s190
        %v192 = vld [vmem:[%s169] sm:$0x3]
        %s193 = sld [smem:[#allocation2 + %s24]]
        %v194 = vstv %s193
        %v195 = vmul.f32 %v192, %v194
        %196 = vst [vmem:[%s191] sm:$0x3] %v195
        %s197 = sand.u32 %s91, 1
        %s198 = scalar_lea.sflag [#allocation4], %s197
        %s199 = sand.u32 %s91, 1
        %s200 = smul.addr %s199, 2
        %s201 = scalar_lea.vmem [#allocation7], %s200
        // Predicated region
        $region37: #{tpu_custom_call.1} parent=27 // pred_check
          %p202 = pneg %p101
        $region38: #{tpu_custom_call.1} parent=27 // pred_check_branch
          %204 = sbr.rel (%p202) target = $region40
        $region39: #{tpu_custom_call.1} parent=27 // pred_region
          %206 = vsyncadd %s198, 0
          %s207 = sadd.s32 %s25, %s24
          %s208 = smul.addr %s207, 2
          %s209 = scalar_lea.hbm %s2, %s208
          %s211 = sshll.u32 %s201, 4
          %s212 = int_to_ptr.vmem [resolvable:$true] %s211
          %s213 = sshll.u32 %s209, 4
          %s214 = int_to_ptr.hbm [resolvable:$true] %s213
          %216 = dma.vmem_to_hbm [thread:$0]  %s212, 32, %s214, %s198
        $region40: #{tpu_custom_call.1} parent=27 // pred_fallthru
          _
      $region28: #{tpu_custom_call.1} parent=5 // pred_fallthru
        _
      %p217 = scmp.le.s32.totalorder 2, %s15
      // Predicated region
      $region41: #{tpu_custom_call.1} parent=5 // pred_check
        %p218 = pneg %p217
      $region42: #{tpu_custom_call.1} parent=5 // pred_check_branch
        %220 = sbr.rel (%p218) target = $region44
      $region43: #{tpu_custom_call.1} parent=5 // pred_region
        %s221 = ssub.s32 %s15, 2
        // Predicated region
        $region45: #{tpu_custom_call.1} parent=43 // pred_check
          %p222 = pneg %p107
        $region46: #{tpu_custom_call.1} parent=43 // pred_check_branch
          %224 = sbr.rel (%p222) target = $region48
        $region47: #{tpu_custom_call.1} parent=43 // pred_region
          %s225 = sand.u32 %s92, 1
          %s226 = scalar_lea.sflag [#allocation4], %s225
          %s227 = sand.u32 %s92, 1
          %s228 = smul.addr %s227, 2
          %s229 = scalar_lea.vmem [#allocation7], %s228
          %231 = dma.done %s226, 32
        $region48: #{tpu_custom_call.1} parent=43 // pred_fallthru
          _
      $region44: #{tpu_custom_call.1} parent=5 // pred_fallthru
        _
    $region6: #{tpu_custom_call.1} parent=1 // loop_footer
      %s19 = sadd.s32 1, %s15
    $region7: #{tpu_custom_call.1} parent=1 // loop_footer_branch
      %14 = sbr.rel target = $region3
    $region8: #{tpu_custom_call.1} parent=1 // loop_exit
      _
    %232 = vsyncpa [#allocation3], 1
    %s233 = scalar_lea.sflag [#allocation3], 1
    %234 = vsyncpa %s233, 1
    %235 = vsyncpa [#allocation4], 1
    %s236 = scalar_lea.sflag [#allocation4], 1
    %237 = vsyncpa %s236, 1
    %238 = vsyncpa [#allocation5], 1
    %s239 = scalar_lea.sflag [#allocation5], 1
    %240 = vsyncpa %s239, 1

</llo_original>
